<compile_context>
chip_gen: v5e
topology: v5e:2x2
jax: 0.10.0
libtpu: 0.0.40
codegen_flags: <defaults>
</compile_context>

<pallas_src>
import itertools

import numpy as np
import jax
import jax.numpy as jnp
from jax.experimental import pallas as pl
from jax.experimental.pallas import tpu as pltpu


# ---------------------------------------------------------------------------
# Deterministic constants (standard JPEG tables + IDCT basis), as in DiffJPEG.
# ---------------------------------------------------------------------------
def make_y_table() -> np.ndarray:
    t = np.array(
        [[16, 11, 10, 16, 24, 40, 51, 61],
         [12, 12, 14, 19, 26, 58, 60, 55],
         [14, 13, 16, 24, 40, 57, 69, 56],
         [14, 17, 22, 29, 51, 87, 80, 62],
         [18, 22, 37, 56, 68, 109, 103, 77],
         [24, 35, 55, 64, 81, 104, 113, 92],
         [49, 64, 78, 87, 103, 121, 120, 101],
         [72, 92, 95, 98, 112, 100, 103, 99]], dtype=np.float32).T
    return t


def make_c_table() -> np.ndarray:
    t = np.empty((8, 8), dtype=np.float32)
    t.fill(99)
    t[:4, :4] = np.array([[17, 18, 24, 47],
                          [18, 21, 26, 66],
                          [24, 26, 56, 99],
                          [66, 99, 99, 99]], dtype=np.float32).T
    return t


def _idct_basis() -> np.ndarray:
    basis = np.zeros((8, 8, 8, 8), dtype=np.float32)
    for x, y, u, v in itertools.product(range(8), repeat=4):
        basis[x, y, u, v] = (np.cos((2 * u + 1) * x * np.pi / 16) *
                             np.cos((2 * v + 1) * y * np.pi / 16))
    return basis


def _alpha_8x8() -> np.ndarray:
    a = np.array([1.0 / np.sqrt(2)] + [1.0] * 7, dtype=np.float32)
    return np.outer(a, a).astype(np.float32)


def make_idct_weight(table: np.ndarray, factor: float) -> np.ndarray:
    """Fold dequantize (table*factor), alpha scaling, 0.25 and the IDCT basis
    into a single (64, 64) matrix:  idct_flat = coeff_flat @ W + 128."""
    scale = 0.25 * table.astype(np.float32) * float(factor) * _alpha_8x8()
    w = (scale[:, :, None, None] * _idct_basis()).reshape(64, 64)
    return np.ascontiguousarray(w, dtype=np.float32)


def _round_up(x: int, m: int) -> int:
    return ((x + m - 1) // m) * m


# ---------------------------------------------------------------------------
# Kernel A: dequantize + IDCT as one lane-dense matmul (+128 bias).
#   x_ref: (TR, 128)  -- two 8x8 blocks packed per 128-lane row
#   w_ref: (128, 128) -- block-diag(W64, W64), constant across grid steps
# ---------------------------------------------------------------------------
def _dequant_idct_kernel(x_ref, w_ref, o_ref):
    o_ref[...] = jnp.dot(x_ref[...], w_ref[...],
                         preferred_element_type=jnp.float32) + 128.0


def dequant_idct(blocks: jax.Array, w64: np.ndarray,
                 max_tile_rows: int = 2048) -> jax.Array:
    """blocks: (B, n_blocks, 8, 8) quantized coeffs -> spatial 8x8 blocks."""
    B, n, _, _ = blocks.shape
    num_blocks = B * n
    total = num_blocks * 64

    flat = blocks.astype(jnp.float32).reshape(-1)          # (total,)
    rows = -(-total // 128)                                 # 2 blocks per row
    tile = min(max_tile_rows, _round_up(rows, 8))
    rows_p = _round_up(rows, tile)
    pad = rows_p * 128 - total
    if pad:
        flat = jnp.pad(flat, (0, pad))
    x2 = flat.reshape(rows_p, 128)                          # lane-dense rows

    w128 = np.zeros((128, 128), dtype=np.float32)
    w128[:64, :64] = w64
    w128[64:, 64:] = w64
    w128 = jnp.asarray(w128)

    out2 = pl.pallas_call(
        _dequant_idct_kernel,
        out_shape=jax.ShapeDtypeStruct((rows_p, 128), jnp.float32),
        grid_spec=pltpu.PrefetchScalarGridSpec(
            num_scalar_prefetch=0,
            grid=(rows_p // tile,),
            in_specs=[
                pl.BlockSpec((tile, 128), lambda i: (i, 0)),
                # same (only) block every step -> stays resident in VMEM
                pl.BlockSpec((128, 128), lambda i: (0, 0)),
            ],
            out_specs=pl.BlockSpec((tile, 128), lambda i: (i, 0)),
        ),
        compiler_params=pltpu.CompilerParams(
            dimension_semantics=("parallel",)),
    )(x2, w128)

    return out2.reshape(-1)[:total].reshape(B, n, 8, 8)


# ---------------------------------------------------------------------------
# Kernel B: YCbCr -> RGB + clamp [0,255] + *(1/255), lane-dense elementwise.
# ---------------------------------------------------------------------------
def _ycbcr_to_rgb_kernel(y_ref, cb_ref, cr_ref, r_ref, g_ref, b_ref):
    y = y_ref[...]
    cb = cb_ref[...] - 128.0
    cr = cr_ref[...] - 128.0
    r = y + 1.402 * cr
    g = y - 0.344136 * cb - 0.714136 * cr
    b = y + 1.772 * cb
    inv255 = jnp.float32(1.0 / 255.0)
    r_ref[...] = jnp.clip(r, 0.0, 255.0) * inv255
    g_ref[...] = jnp.clip(g, 0.0, 255.0) * inv255
    b_ref[...] = jnp.clip(b, 0.0, 255.0) * inv255


def ycbcr_to_rgb(y_img: jax.Array, cb_img: jax.Array, cr_img: jax.Array,
                 max_tile_rows: int = 1024) -> jax.Array:
    B, H, W = y_img.shape
    total = B * H * W
    rows = -(-total // 128)
    tile = min(max_tile_rows, _round_up(rows, 8))
    rows_p = _round_up(rows, tile)
    pad = rows_p * 128 - total

    def pack(v):
        f = v.astype(jnp.float32).reshape(-1)
        if pad:
            f = jnp.pad(f, (0, pad))
        return f.reshape(rows_p, 128)

    yf, cbf, crf = pack(y_img), pack(cb_img), pack(cr_img)

    r, g, b = pl.pallas_call(
        _ycbcr_to_rgb_kernel,
        out_shape=tuple(jax.ShapeDtypeStruct((rows_p, 128), jnp.float32)
                        for _ in range(3)),
        grid_spec=pltpu.PrefetchScalarGridSpec(
            num_scalar_prefetch=0,
            grid=(rows_p // tile,),
            in_specs=[pl.BlockSpec((tile, 128), lambda i: (i, 0))] * 3,
            out_specs=[pl.BlockSpec((tile, 128), lambda i: (i, 0))] * 3,
        ),
        compiler_params=pltpu.CompilerParams(
            dimension_semantics=("parallel",)),
    )(yf, cbf, crf)

    def unpack(v):
        return v.reshape(-1)[:total].reshape(B, H, W)

    return jnp.stack([unpack(r), unpack(g), unpack(b)], axis=1)  # (B,3,H,W)


# ---------------------------------------------------------------------------
# Pure layout plumbing (wrapper-side jnp ops).
# ---------------------------------------------------------------------------
def merge_blocks(blocks: jax.Array, height: int, width: int) -> jax.Array:
    B = blocks.shape[0]
    x = blocks.reshape(B, height // 8, width // 8, 8, 8)
    x = jnp.transpose(x, (0, 1, 3, 2, 4))
    return x.reshape(B, height, width)


def upsample2x(x: jax.Array) -> jax.Array:
    return jnp.repeat(jnp.repeat(x, 2, axis=1), 2, axis=2)


# ---------------------------------------------------------------------------
# Full decompress_jpeg forward.
# ---------------------------------------------------------------------------
def decompress_jpeg(y: jax.Array, cb: jax.Array, cr: jax.Array,
                    height: int, width: int, factor: float = 1.0) -> jax.Array:
    w_y = make_idct_weight(make_y_table(), factor)
    w_c = make_idct_weight(make_c_table(), factor)

    y_sp = dequant_idct(y, w_y)
    cb_sp = dequant_idct(cb, w_c)
    cr_sp = dequant_idct(cr, w_c)

    y_img = merge_blocks(y_sp, height, width)
    cb_img = upsample2x(merge_blocks(cb_sp, height // 2, width // 2))
    cr_img = upsample2x(merge_blocks(cr_sp, height // 2, width // 2))

    return ycbcr_to_rgb(y_img, cb_img, cr_img)


# ---------------------------------------------------------------------------
# Pure numpy reference (mirrors the PyTorch module exactly).
# ---------------------------------------------------------------------------
def decompress_jpeg_ref(y, cb, cr, height, width, factor=1.0):
    y = np.asarray(y, np.float32)
    cb = np.asarray(cb, np.float32)
    cr = np.asarray(cr, np.float32)
    alpha, basis = _alpha_8x8(), _idct_basis()

    def channel(q, table, h, w):
        deq = q * (table * factor)
        res = 0.25 * np.tensordot(deq * alpha, basis, axes=2) + 128.0
        B = q.shape[0]
        x = res.reshape(B, h // 8, w // 8, 8, 8).transpose(0, 1, 3, 2, 4)
        return x.reshape(B, h, w)

    yi = channel(y, make_y_table(), height, width)
    cbi = channel(cb, make_c_table(), height // 2, width // 2)
    cri = channel(cr, make_c_table(), height // 2, width // 2)
    cbi = np.repeat(np.repeat(cbi, 2, axis=1), 2, axis=2)
    cri = np.repeat(np.repeat(cri, 2, axis=1), 2, axis=2)

    img = np.stack([yi, cbi, cri], axis=-1)
    shift = np.array([0.0, -128.0, -128.0], np.float32)
    matrix = np.array([[1.0, 0.0, 1.402],
                       [1.0, -0.344136, -0.714136],
                       [1.0, 1.772, 0.0]], dtype=np.float32).T
    res = np.tensordot(img + shift, matrix, axes=1).transpose(0, 3, 1, 2)
    res = np.minimum(255.0, np.maximum(0.0, res))
    return res / 255.0


if __name__ == "__main__":
    key = jax.random.PRNGKey(0)
    k1, k2, k3 = jax.random.split(key, 3)

    B, H, W = 2, 16, 16
    n_y = (H // 8) * (W // 8)          # 4
    n_c = (H // 16) * (W // 16)        # 1  (chroma is stored at half res)

    # Quantized (integer-valued) DCT coefficients, small shapes.
    y_in = jnp.round(jax.random.normal(k1, (B, n_y, 8, 8), jnp.float32) * 6.0)
    cb_in = jnp.round(jax.random.normal(k2, (B, n_c, 8, 8), jnp.float32) * 4.0)
    cr_in = jnp.round(jax.random.normal(k3, (B, n_c, 8, 8), jnp.float32) * 4.0)

    out = decompress_jpeg(y_in, cb_in, cr_in, H, W, factor=1.0)
    out = jax.block_until_ready(out)
    assert out.shape == (B, 3, H, W)

    ref = decompress_jpeg_ref(y_in, cb_in, cr_in, H, W, factor=1.0)
    np.testing.assert_allclose(np.asarray(out), ref, atol=1e-3, rtol=1e-3)

    print("KERNEL_OK")
</pallas_src>

<mosaic_0001>
module attributes {stable_mosaic.version = 11 : i64} {
  func.func @_dequant_idct_kernel(%arg0: i32, %arg1: memref<8x128xf32, #tpu.memory_space<vmem>>, %arg2: memref<128x128xf32, #tpu.memory_space<vmem>>, %arg3: memref<8x128xf32, #tpu.memory_space<vmem>>) attributes {dimension_semantics = [#tpu.dimension_semantics<parallel>], iteration_bounds = array<i64: 1>, scalar_prefetch = 0 : i64, scratch_operands = 0 : i64, tpu.core_type = #tpu.core_type<tc>, window_params = [{transform_indices = @transform_0, window_bounds = array<i64: 8, 128>}, {pipeline_mode = #tpu.pipeline_mode<synchronous>, transform_indices = @transform_1, window_bounds = array<i64: 128, 128>}, {transform_indices = @transform_2, window_bounds = array<i64: 8, 128>}]} {
    %c0 = arith.constant 0 : index
    %c0_0 = arith.constant 0 : index
    %0 = vector.load %arg1[%c0, %c0_0] : memref<8x128xf32, #tpu.memory_space<vmem>>, vector<8x128xf32>
    %c0_1 = arith.constant 0 : index
    %c0_2 = arith.constant 0 : index
    %1 = vector.load %arg2[%c0_1, %c0_2] : memref<128x128xf32, #tpu.memory_space<vmem>>, vector<128x128xf32>
    %cst = arith.constant dense<0.000000e+00> : vector<8x128xf32>
    %2 = tpu.matmul %0, %1, %cst {dimension_numbers = #tpu.dot_dimension_numbers<[1], [0], [0], [1], [0, 0, 1, 1], [], []>} : vector<8x128xf32>, vector<128x128xf32>, vector<8x128xf32> -> vector<8x128xf32>
    %cst_3 = arith.constant 1.280000e+02 : f32
    %3 = vector.broadcast %cst_3 : f32 to vector<8x128xf32>
    %4 = arith.addf %2, %3 : vector<8x128xf32>
    %c0_4 = arith.constant 0 : index
    %c0_5 = arith.constant 0 : index
    %5 = vector.load %arg3[%c0_4, %c0_5] : memref<8x128xf32, #tpu.memory_space<vmem>>, vector<8x128xf32>
    tpu.vector_store %arg3[%c0_4, %c0_5], %4 {strides = array<i32>} : memref<8x128xf32, #tpu.memory_space<vmem>>, vector<8x128xf32>,
    return
  }
  func.func @transform_0(%arg0: i32) -> (i32, i32) {
    %c0_i32 = arith.constant 0 : i32
    %c0_i32_0 = arith.constant 0 : i32
    return %arg0, %c0_i32 : i32, i32
  }
  func.func @transform_1(%arg0: i32) -> (i32, i32) {
    %c0_i32 = arith.constant 0 : i32
    %c0_i32_0 = arith.constant 0 : i32
    %c0_i32_1 = arith.constant 0 : i32
    return %c0_i32, %c0_i32_0 : i32, i32
  }
  func.func @transform_2(%arg0: i32) -> (i32, i32) {
    %c0_i32 = arith.constant 0 : i32
    %c0_i32_0 = arith.constant 0 : i32
    return %arg0, %c0_i32 : i32, i32
  }
}

</mosaic_0001>

<llo_original>
// kernel: tpu_custom_call.1
$region0: #{tpu_custom_call.1}
  #allocation0 [shape = 'u32[]', space=smem, size = 0x4, offset = 0x4, fixed_abs, tag = 'smem constant byte address 0x4 - core index']
  #allocation1 [shape = 'u32[72,128]{1,0:T(1,128)}', space=vmem, size = 0x9000, scoped, tag = 'internal scratch']
  %s0 = inlined_call_operand.hbm [shape: f32[8,128], index: 0, kind: input, shape index: {}]
  %s1 = inlined_call_operand.hbm [shape: f32[128,128], index: 1, kind: input, shape index: {}]
  %s2 = inlined_call_operand.hbm [shape: f32[8,128], index: 2, kind: output, shape index: {}]
  %s3 = sld [smem:[#allocation0]]
  $region26: #{tpu_custom_call.1} parent=0
    _
  %s5 = ssub.s32 1, %s3
  %s6 = scalar_select 0, %s5, %s3
  $region1: #{tpu_custom_call.1} parent=0
    #allocation2 [shape = 'u8[4096]{0}', space=vmem, size = 0x1000, scoped, tag = 'input window, operand 0, single buffered']
    #allocation3 [shape = 's32[1]{0}', space=sflag, size = 0x4, scoped, tag = 'scoped memory for tpu_custom_call.1']
    #allocation4 [shape = 's32[1]{0}', space=sflag, size = 0x4, scoped, tag = 'scoped memory for tpu_custom_call.1']
    #allocation5 [shape = 'u8[65536]{0}', space=vmem, size = 0x10000, scoped, tag = 'input window, operand 1, single buffered']
    #allocation6 [shape = 's32[1]{0}', space=sflag, size = 0x4, scoped, tag = 'scoped memory for tpu_custom_call.1']
    #allocation7 [shape = 'u8[4096]{0}', space=vmem, size = 0x1000, scoped, tag = 'output window, operand 0, single buffered']
    %7 = vsyncpa [#allocation3], 0
    %8 = vsyncpa [#allocation6], 0
    %9 = vsyncpa [#allocation4], 0
    // Predicated region
    $region2: #{tpu_custom_call.1} parent=1 // pred_check
      _
    $region3: #{tpu_custom_call.1} parent=1 // pred_check_branch
      %11 = sbr.rel (0) target = $region5
    $region4: #{tpu_custom_call.1} parent=1 // pred_region
      %13 = vsyncadd [#allocation3], 0
      %s15 = sshll.u32 %s0, 4
      %s16 = int_to_ptr.hbm [resolvable:$true] %s15
      %s17 = sshll.u32 [#allocation2], 4
      %s18 = int_to_ptr.vmem [resolvable:$true] %s17
      %20 = dma.hbm_to_vmem [thread:$0]  %s16, 128, %s18, [#allocation3]
    $region5: #{tpu_custom_call.1} parent=1 // pred_fallthru
      _
    // Predicated region
    $region6: #{tpu_custom_call.1} parent=1 // pred_check
      _
    $region7: #{tpu_custom_call.1} parent=1 // pred_check_branch
      %22 = sbr.rel (0) target = $region9
    $region8: #{tpu_custom_call.1} parent=1 // pred_region
      %24 = vsyncadd [#allocation6], 0
      %s25 = sshll.u32 %s1, 4
      %s26 = int_to_ptr.hbm [resolvable:$true] %s25
      %s27 = sshll.u32 [#allocation5], 4
      %s28 = int_to_ptr.vmem [resolvable:$true] %s27
      %33 = dma.hbm_to_vmem [thread:$0]  %s26, 2048, %s28, [#allocation6], 128, 128, 8
    $region9: #{tpu_custom_call.1} parent=1 // pred_fallthru
      _
    // Predicated region
    $region10: #{tpu_custom_call.1} parent=1 // pred_check
      _
    $region11: #{tpu_custom_call.1} parent=1 // pred_check_branch
      %35 = sbr.rel (0) target = $region13
    $region12: #{tpu_custom_call.1} parent=1 // pred_region
      %37 = dma.done [#allocation3], 128
    $region13: #{tpu_custom_call.1} parent=1 // pred_fallthru
      _
    // Predicated region
    $region14: #{tpu_custom_call.1} parent=1 // pred_check
      _
    $region15: #{tpu_custom_call.1} parent=1 // pred_check_branch
      %39 = sbr.rel (0) target = $region17
    $region16: #{tpu_custom_call.1} parent=1 // pred_region
      %41 = dma.done [#allocation6], 2048
    $region17: #{tpu_custom_call.1} parent=1 // pred_fallthru
      _
    %v42 = vld [vmem:[#allocation2] sm:$0xff]
    %v43 = vld [vmem:[#allocation5] sm:$0xff]
    %v44 = vld [vmem:[#allocation5 + $0x8] sm:$0xff]
    %v45 = vld [vmem:[#allocation5 + $0x10] sm:$0xff]
    %v46 = vld [vmem:[#allocation5 + $0x18] sm:$0xff]
    %v47 = vld [vmem:[#allocation5 + $0x20] sm:$0xff]
    %v48 = vld [vmem:[#allocation5 + $0x28] sm:$0xff]
    %v49 = vld [vmem:[#allocation5 + $0x30] sm:$0xff]
    %v50 = vld [vmem:[#allocation5 + $0x38] sm:$0xff]
    %v51 = vld [vmem:[#allocation5 + $0x40] sm:$0xff]
    %v52 = vld [vmem:[#allocation5 + $0x48] sm:$0xff]
    %v53 = vld [vmem:[#allocation5 + $0x50] sm:$0xff]
    %v54 = vld [vmem:[#allocation5 + $0x58] sm:$0xff]
    %v55 = vld [vmem:[#allocation5 + $0x60] sm:$0xff]
    %v56 = vld [vmem:[#allocation5 + $0x68] sm:$0xff]
    %v57 = vld [vmem:[#allocation5 + $0x70] sm:$0xff]
    %v58 = vld [vmem:[#allocation5 + $0x78] sm:$0xff]
    %59 = vmatpush.msra.mxu0 %v58
    %60 = vmatpush.msra.mxu0 %v57
    %61 = vmatpush.msra.mxu0 %v56
    %62 = vmatpush.msra.mxu0 %v55
    %63 = vmatpush.msra.mxu0 %v54
    %64 = vmatpush.msra.mxu0 %v53
    %65 = vmatpush.msra.mxu0 %v52
    %66 = vmatpush.msra.mxu0 %v51
    %67 = vmatpush.msra.mxu0 %v50
    %68 = vmatpush.msra.mxu0 %v49
    %69 = vmatpush.msra.mxu0 %v48
    %70 = vmatpush.msra.mxu0 %v47
    %71 = vmatpush.msra.mxu0 %v46
    %72 = vmatpush.msra.mxu0 %v45
    %73 = vmatpush.msra.mxu0 %v44
    %74 = vmatpush.msra.mxu0 %v43
    %75 = vmatmul.f32.gmra.mxu0 %v42
    %v76 = vpop.f32.mrf.mxu0
    %v77 = vadd.f32 128.0, %v76
    %78 = vdwg.mxu0
    %79 = vst [vmem:[#allocation7] sm:$0xff] %v77
    // Predicated region
    $region18: #{tpu_custom_call.1} parent=1 // pred_check
      _
    $region19: #{tpu_custom_call.1} parent=1 // pred_check_branch
      %81 = sbr.rel (0) target = $region21
    $region20: #{tpu_custom_call.1} parent=1 // pred_region
      %83 = vsyncadd [#allocation4], 0
      %s85 = sshll.u32 [#allocation7], 4
      %s86 = int_to_ptr.vmem [resolvable:$true] %s85
      %s87 = sshll.u32 %s2, 4
      %s88 = int_to_ptr.hbm [resolvable:$true] %s87
      %90 = dma.vmem_to_hbm [thread:$0]  %s86, 128, %s88, [#allocation4]
    $region21: #{tpu_custom_call.1} parent=1 // pred_fallthru
      _
    // Predicated region
    $region22: #{tpu_custom_call.1} parent=1 // pred_check
      _
    $region23: #{tpu_custom_call.1} parent=1 // pred_check_branch
      %92 = sbr.rel (0) target = $region25
    $region24: #{tpu_custom_call.1} parent=1 // pred_region
      %94 = dma.done [#allocation4], 128
    $region25: #{tpu_custom_call.1} parent=1 // pred_fallthru
      _
    %95 = vsyncpa [#allocation3], 1
    %96 = vsyncpa [#allocation6], 1
    %97 = vsyncpa [#allocation4], 1

</llo_original>
